<compile_context>
chip_gen: v6e
topology: v6e:2x2x1
jax: 0.10.0
libtpu: 0.0.40
codegen_flags: <defaults>
</compile_context>

<pallas_src>
import functools

import jax
import jax.numpy as jnp
from jax.experimental import pallas as pl
from jax.experimental.pallas import tpu as pltpu


# ---------------------------------------------------------------------------
# hardware introspection (best effort; every query has a safe fallback)
# ---------------------------------------------------------------------------
def _device_kind():
    try:
        return jax.devices()[0].device_kind.lower()
    except Exception:
        return ""


def _vmem_capacity_bytes():
    try:
        return int(pltpu.get_tpu_info().vmem_capacity_bytes)
    except Exception:
        pass
    kind = _device_kind()
    if "v5" in kind or "v6" in kind:
        return 128 << 20
    # v7x-class or unknown: assume the small (64 MiB) VMEM to stay safe.
    return 64 << 20


def _has_native_bf16_vpu():
    kind = _device_kind()
    return ("v6" in kind) or ("v7" in kind) or ("tpu7" in kind) or ("trillium" in kind)


# ---------------------------------------------------------------------------
# kernel
# ---------------------------------------------------------------------------
def _hardswish_kernel(x_ref, o_ref, *, compute_dtype):
    # One cast in, one cast out (no-op when compute_dtype == input dtype).
    x = x_ref[...].astype(compute_dtype)
    # hardsigmoid = relu6(x + 3) / 6 ; hardswish = x * hardsigmoid
    hs = jnp.clip(x + 3.0, 0.0, 6.0) * (1.0 / 6.0)
    o_ref[...] = (x * hs).astype(o_ref.dtype)


def _hardswish_jnp(x):
    # Single fused XLA elementwise pass; used for ragged element counts where
    # a Pallas wrapper would need pad/slice round trips (extra HBM passes).
    return x * (jnp.clip(x + 3.0, 0.0, 6.0) * (1.0 / 6.0))


def _pick_block_rows(n_rows, lanes, itemsize, target_bytes, min_steps,
                     min_block_bytes=1 << 20):
    """Per-block row count (second-to-last dim of the block)."""
    # dtype-aware sublane quantum: f32 -> 8, bf16 -> 16, int8/fp8 -> 32
    row_quant = max(8, 32 // itemsize)
    if n_rows <= row_quant:
        # single block covering the full row extent (valid: equals array dim)
        return n_rows
    bytes_per_row = lanes * itemsize
    # rows giving ~target_bytes per block, rounded down to the sublane quantum
    br = max(row_quant, (target_bytes // bytes_per_row) // row_quant * row_quant)
    # prefer >= min_steps grid steps (software pipelining; >= 4 steps per core
    # on v7x's two TensorCores) as long as each block stays >= ~1 MiB.
    br_steps = (n_rows // min_steps) // row_quant * row_quant
    if br_steps * bytes_per_row >= min_block_bytes:
        br = min(br, br_steps)
    # no point in a block larger than the (sublane-rounded-up) row count
    n_rows_up = (n_rows + row_quant - 1) // row_quant * row_quant
    return min(br, n_rows_up)


# ---------------------------------------------------------------------------
# public wrapper
# ---------------------------------------------------------------------------
def hardswish(x, *, block_bytes=None, donate=False, input_buffers=2):
    """Elementwise hardswish; any shape, float dtype. Shape/dtype preserved.

    Note: `donate=True` only saves the output HBM allocation if the caller
    also donates `x` at the jit boundary (donate_argnums); it never saves
    bandwidth for this op.
    """
    orig_shape = x.shape
    orig_dtype = x.dtype
    total = x.size
    if total == 0:
        return x
    itemsize = jnp.dtype(orig_dtype).itemsize

    # Widest lane-aligned last dim that divides the element count, so the
    # flatten-to-2D reshape is a free bitcast (no extra HBM pass).
    lanes = None
    for cand in (512, 256, 128):
        if total % cand == 0:
            lanes = cand
            break
    if lanes is None:
        # Ragged element count: any Pallas wrapper here needs pad+slice (or
        # prefix-copy+concat) = >=2 extra full HBM passes, i.e. ~3x traffic.
        # One fused XLA elementwise pass (read N, write N) is strictly better.
        # TODO(synk): a zero-extra-pass Pallas path for ragged sizes would need
        # a manual ANY-space DMA kernel with a partial tail copy.
        return _hardswish_jnp(x)

    n_rows = total // lanes
    x2d = x.reshape(n_rows, lanes)  # free bitcast

    # Generation-aware tiling.
    vmem_cap = _vmem_capacity_bytes()
    small_vmem = vmem_cap <= (64 << 20)           # v7x-class
    if block_bytes is None:
        block_bytes = (8 << 20) if small_vmem else (16 << 20)
    # live VMEM = 2 buffers x (in + out) x block; keep headroom under physical.
    vmem_limit = (48 << 20) if small_vmem else (80 << 20)
    min_steps = 8 if small_vmem else 4            # >= 4 steps per TensorCore

    br = _pick_block_rows(n_rows, lanes, itemsize, block_bytes, min_steps)
    grid = (pl.cdiv(n_rows, br),)

    # On chips without bf16 VALUs (v5e and older), compute in f32 (one cast in,
    # one cast out); on v6e/v7x keep the native dtype.
    if itemsize < 4 and not _has_native_bf16_vpu():
        compute_dtype = jnp.float32
    else:
        compute_dtype = orig_dtype
    kernel = functools.partial(_hardswish_kernel, compute_dtype=compute_dtype)

    # Optional deeper input pipelining (tuning knob; default depth 2).
    in_spec_kwargs = {}
    if input_buffers != 2:
        in_spec_kwargs["pipeline_mode"] = pl.Buffered(input_buffers)
    in_spec = pl.BlockSpec((br, lanes), lambda i: (i, 0), **in_spec_kwargs)

    out2d = pl.pallas_call(
        kernel,
        out_shape=jax.ShapeDtypeStruct((n_rows, lanes), orig_dtype),
        grid_spec=pltpu.PrefetchScalarGridSpec(
            num_scalar_prefetch=0,
            grid=grid,
            in_specs=[in_spec],
            out_specs=pl.BlockSpec((br, lanes), lambda i: (i, 0)),
        ),
        compiler_params=pltpu.CompilerParams(
            dimension_semantics=("parallel",),
            vmem_limit_bytes=vmem_limit,
        ),
        cost_estimate=pl.CostEstimate(
            flops=5 * total,
            transcendentals=0,
            bytes_accessed=2 * total * itemsize,
        ),
        input_output_aliases=({0: 0} if donate else {}),
    )(x2d)

    return out2d.reshape(orig_shape)


# ---------------------------------------------------------------------------
# reference + tests
# ---------------------------------------------------------------------------
def _hardswish_ref(x):
    return x * (jnp.clip(x + 3.0, 0.0, 6.0) * (1.0 / 6.0))


if __name__ == "__main__":
    key = jax.random.PRNGKey(0)

    # main check: small NCHW activation, f32 (lane-dense no-copy path)
    x = jax.random.normal(key, (2, 4, 16, 16), dtype=jnp.float32) * 3.0
    out = jax.block_until_ready(hardswish(x))
    ref = _hardswish_ref(x)
    assert out.shape == x.shape and out.dtype == x.dtype
    assert jnp.allclose(out, ref, atol=1e-5, rtol=1e-5)

    # ragged element count: exercises the single-pass fused fallback path
    x2 = jax.random.normal(jax.random.PRNGKey(1), (2, 3, 17, 19), dtype=jnp.float32)
    out2 = jax.block_until_ready(hardswish(x2))
    assert jnp.allclose(out2, _hardswish_ref(x2), atol=1e-5, rtol=1e-5)

    # row count not divisible by the block: exercises the masked last block
    x3 = jax.random.normal(jax.random.PRNGKey(2), (1, 8, 100, 100), dtype=jnp.float32)
    out3 = jax.block_until_ready(hardswish(x3))
    assert jnp.allclose(out3, _hardswish_ref(x3), atol=1e-5, rtol=1e-5)

    # bf16 (common inference dtype): exercises the dtype-aware sublane quantum
    # and (on v5e) the f32-compute path inside the kernel
    xb = (jax.random.normal(jax.random.PRNGKey(3), (2, 4, 16, 16)) * 3.0).astype(jnp.bfloat16)
    outb = jax.block_until_ready(hardswish(xb))
    refb = _hardswish_ref(xb.astype(jnp.float32))
    assert outb.dtype == jnp.bfloat16
    assert jnp.allclose(outb.astype(jnp.float32), refb, atol=5e-2, rtol=5e-2)

    print("KERNEL_OK")
</pallas_src>

<mosaic_0001>
module attributes {stable_mosaic.version = 11 : i64} {
  func.func @_hardswish_kernel(%arg0: i32, %arg1: memref<4x512xf32, #tpu.memory_space<vmem>>, %arg2: memref<4x512xf32, #tpu.memory_space<vmem>>) attributes {dimension_semantics = [#tpu.dimension_semantics<parallel>], iteration_bounds = array<i64: 1>, scalar_prefetch = 0 : i64, scratch_operands = 0 : i64, tpu.core_type = #tpu.core_type<tc>, window_params = [{transform_indices = @transform_0, window_bounds = array<i64: 4, 512>}, {transform_indices = @transform_1, window_bounds = array<i64: 4, 512>}]} {
    %c0 = arith.constant 0 : index
    %c0_0 = arith.constant 0 : index
    %0 = vector.load %arg1[%c0, %c0_0] : memref<4x512xf32, #tpu.memory_space<vmem>>, vector<4x512xf32>
    %cst = arith.constant 3.000000e+00 : f32
    %1 = vector.broadcast %cst : f32 to vector<4x512xf32>
    %2 = arith.addf %0, %1 : vector<4x512xf32>
    %cst_1 = arith.constant 0.000000e+00 : f32
    %cst_2 = arith.constant 6.000000e+00 : f32
    %3 = vector.broadcast %cst_1 : f32 to vector<4x512xf32>
    %4 = arith.maximumf %3, %2 : vector<4x512xf32>
    %5 = vector.broadcast %cst_2 : f32 to vector<4x512xf32>
    %6 = arith.minimumf %5, %4 : vector<4x512xf32>
    %cst_3 = arith.constant 0.166666672 : f32
    %7 = vector.broadcast %cst_3 : f32 to vector<4x512xf32>
    %8 = arith.mulf %6, %7 : vector<4x512xf32>
    %9 = arith.mulf %0, %8 : vector<4x512xf32>
    %c0_4 = arith.constant 0 : index
    %c0_5 = arith.constant 0 : index
    %10 = vector.load %arg2[%c0_4, %c0_5] : memref<4x512xf32, #tpu.memory_space<vmem>>, vector<4x512xf32>
    tpu.vector_store %arg2[%c0_4, %c0_5], %9 {strides = array<i32>} : memref<4x512xf32, #tpu.memory_space<vmem>>, vector<4x512xf32>,
    return
  }
  func.func @transform_0(%arg0: i32) -> (i32, i32) {
    %c0_i32 = arith.constant 0 : i32
    %c0_i32_0 = arith.constant 0 : i32
    return %arg0, %c0_i32 : i32, i32
  }
  func.func @transform_1(%arg0: i32) -> (i32, i32) {
    %c0_i32 = arith.constant 0 : i32
    %c0_i32_0 = arith.constant 0 : i32
    return %arg0, %c0_i32 : i32, i32
  }
}

</mosaic_0001>

<llo_original>
// kernel: tpu_custom_call.1
$region0: #{tpu_custom_call.1}
  #allocation0 [shape = 'u32[]', space=smem, size = 0x4, offset = 0x4, fixed_abs, tag = 'smem constant byte address 0x4 - core index']
  #allocation1 [shape = 'u32[144,128]{1,0:T(1,128)}', space=vmem, size = 0x12000, scoped, tag = 'internal scratch']
  %s0 = inlined_call_operand.hbm [shape: f32[4,512], index: 0, kind: input, shape index: {}]
  %s1 = inlined_call_operand.hbm [shape: f32[4,512], index: 1, kind: output, shape index: {}]
  %s2 = sld [smem:[#allocation0]]
  $region18: #{tpu_custom_call.1} parent=0
    _
  %s4 = ssub.s32 1, %s2
  %s5 = scalar_select 0, %s4, %s2
  $region1: #{tpu_custom_call.1} parent=0
    #allocation2 [shape = 'u8[8192]{0}', space=vmem, size = 0x2000, scoped, tag = 'input window, operand 0, single buffered']
    #allocation3 [shape = 's32[1]{0}', space=sflag, size = 0x4, scoped, tag = 'scoped memory for tpu_custom_call.1']
    #allocation4 [shape = 's32[1]{0}', space=sflag, size = 0x4, scoped, tag = 'scoped memory for tpu_custom_call.1']
    #allocation5 [shape = 'u8[8192]{0}', space=vmem, size = 0x2000, scoped, tag = 'output window, operand 0, single buffered']
    %6 = vsyncpa [#allocation3], 0
    %7 = vsyncpa [#allocation4], 0
    // Predicated region
    $region2: #{tpu_custom_call.1} parent=1 // pred_check
      _
    $region3: #{tpu_custom_call.1} parent=1 // pred_check_branch
      %9 = sbr.rel (0) target = $region5
    $region4: #{tpu_custom_call.1} parent=1 // pred_region
      %s11 = ssub.s32 256, 256
      %12 = vsyncadd [#allocation3], %s11
      %s14 = sshll.u32 [#allocation2], 4
      %s15 = int_to_ptr.vmem [resolvable:$true] %s14
      %17 = dma.hbm_to_vmem [thread:$0]  %s0, 256, %s15, [#allocation3]
    $region5: #{tpu_custom_call.1} parent=1 // pred_fallthru
      _
    // Predicated region
    $region6: #{tpu_custom_call.1} parent=1 // pred_check
      _
    $region7: #{tpu_custom_call.1} parent=1 // pred_check_branch
      %19 = sbr.rel (0) target = $region9
    $region8: #{tpu_custom_call.1} parent=1 // pred_region
      %20 = dma.done [#allocation3], 256
    $region9: #{tpu_custom_call.1} parent=1 // pred_fallthru
      _
    %v21 = vld [vmem:[#allocation2] sm:$0xff]
    %v22 = vld [vmem:[#allocation2 + $0x8] sm:$0xff]
    %v23 = vadd.f32 %v21, 3.0
    %v24 = vadd.f32 %v22, 3.0
    %v25 = vmax.f32 %v23, 0.0
    %v26 = vmax.f32 %v24, 0.0
    %v27 = vmin.f32 %v25, 6.0
    %v28 = vmin.f32 %v26, 6.0
    %v29 = vmul.f32 %v27, 0.16666667
    %v30 = vmul.f32 %v28, 0.16666667
    %v31 = vmul.f32 %v21, %v29
    %v32 = vmul.f32 %v22, %v30
    %33 = vst [vmem:[#allocation5] sm:$0xff] %v31
    %34 = vst [vmem:[#allocation5 + $0x8] sm:$0xff] %v32
    // Predicated region
    $region10: #{tpu_custom_call.1} parent=1 // pred_check
      _
    $region11: #{tpu_custom_call.1} parent=1 // pred_check_branch
      %36 = sbr.rel (0) target = $region13
    $region12: #{tpu_custom_call.1} parent=1 // pred_region
      %s38 = ssub.s32 256, 256
      %39 = vsyncadd [#allocation4], %s38
      %s41 = sshll.u32 [#allocation5], 4
      %s42 = int_to_ptr.vmem [resolvable:$true] %s41
      %44 = dma.vmem_to_hbm [thread:$0]  %s42, 256, %s1, [#allocation4]
    $region13: #{tpu_custom_call.1} parent=1 // pred_fallthru
      _
    // Predicated region
    $region14: #{tpu_custom_call.1} parent=1 // pred_check
      _
    $region15: #{tpu_custom_call.1} parent=1 // pred_check_branch
      %46 = sbr.rel (0) target = $region17
    $region16: #{tpu_custom_call.1} parent=1 // pred_region
      %47 = dma.done [#allocation4], 256
    $region17: #{tpu_custom_call.1} parent=1 // pred_fallthru
      _
    %48 = vsyncpa [#allocation3], 1
    %49 = vsyncpa [#allocation4], 1

</llo_original>
